<compile_context>
chip_gen: v7x
topology: tpu7x:2x2x1
jax: 0.10.0
libtpu: 0.0.40
codegen_flags: <defaults>
</compile_context>

<pallas_src>
import math
from typing import Any, NamedTuple, Optional

import jax
import jax.numpy as jnp
from jax.experimental import pallas as pl
from jax.experimental.pallas import tpu as pltpu


def _round_up(x: int, m: int) -> int:
    return ((x + m - 1) // m) * m


# ----------------------------------------------------------------------------- kernels
def _linear_kernel_fullk(x_ref, w_ref, b_ref, o_ref):
    """One (tm, tn) output tile, full-K contraction in a single MXU dot."""
    acc = jnp.dot(x_ref[...], w_ref[...], preferred_element_type=jnp.float32)
    o_ref[...] = (acc + b_ref[...]).astype(o_ref.dtype)


def _linear_kernel_ktiled(x_ref, w_ref, b_ref, o_ref, acc_ref):
    """One (tm, tn) output tile; K tiled along grid axis 2 (reduction, 'arbitrary')."""
    k = pl.program_id(2)

    @pl.when(k == 0)
    def _init():
        acc_ref[...] = jnp.zeros_like(acc_ref)

    acc_ref[...] += jnp.dot(x_ref[...], w_ref[...], preferred_element_type=jnp.float32)

    @pl.when(k == pl.num_programs(2) - 1)
    def _finalize():
        o_ref[...] = (acc_ref[...] + b_ref[...]).astype(o_ref.dtype)


# ----------------------------------------------------------------------------- params
class PreparedLinear(NamedTuple):
    w_t: jax.Array       # (Kp, Np) compute_dtype, pre-transposed + zero-padded
    b_row: jax.Array     # (1, Np) float32 (zeros if bias=False)
    in_features: int
    out_features: int
    tn: int
    tk: int
    full_k: bool
    compute_dtype: Any


def prepare_linear_norm_params(
    weight: jax.Array,
    bias: Optional[jax.Array] = None,
    *,
    compute_dtype=jnp.bfloat16,
    tn: int = 512,
    tk: int = 1024,
    full_k_vmem_bytes: int = 20 * 1024 * 1024,
) -> PreparedLinear:
    """One-time weight prep: cast to compute_dtype, transpose (N,K)->(K,N), zero-pad.

    weight: (out_features, in_features) -- PyTorch nn.Linear layout.
    Zero padding of K does not change the contraction; padded N columns are
    sliced off after the kernel.
    """
    N, K = weight.shape
    tn = min(tn, _round_up(N, 128))
    Kp128 = _round_up(K, 128)
    in_bytes = jnp.dtype(compute_dtype).itemsize

    # Full-K footprint estimate (nominal tm=256, f32 output, double-buffered).
    nominal_tm = 256
    fullk_bytes = (2 * (nominal_tm * Kp128 + Kp128 * tn) * in_bytes
                   + 2 * nominal_tm * tn * 4)
    full_k = fullk_bytes <= full_k_vmem_bytes
    if full_k:
        tk = Kp128
        Kp = Kp128
    else:
        tk = min(tk, Kp128)
        Kp = _round_up(K, tk)
    Np = _round_up(N, tn)

    w_t = weight.T  # (K, N)
    if (Kp, Np) != (K, N):
        w_t = jnp.pad(w_t, ((0, Kp - K), (0, Np - N)))
    w_t = w_t.astype(compute_dtype)

    if bias is None:
        b_row = jnp.zeros((1, Np), jnp.float32)
    else:
        b = bias.astype(jnp.float32)
        if Np != N:
            b = jnp.pad(b, (0, Np - N))
        b_row = b.reshape(1, Np)

    return PreparedLinear(w_t, b_row, K, N, tn, tk, full_k, compute_dtype)


# ----------------------------------------------------------------------------- forward
def linear_norm(x, weight, bias=None, *, tm: int = 256, tn: int = 512, tk: int = 1024,
                compute_dtype=jnp.bfloat16, full_k_vmem_bytes: int = 20 * 1024 * 1024):
    """Forward pass of LinearNorm: y = x @ W^T + b.

    `weight` may be a raw (out, in) array or a PreparedLinear (preferred: prepare
    once outside the hot path so the cast/pad/transpose is not paid per call).
    """
    if isinstance(weight, PreparedLinear):
        params = weight
    else:
        params = prepare_linear_norm_params(
            weight, bias, compute_dtype=compute_dtype, tn=tn, tk=tk,
            full_k_vmem_bytes=full_k_vmem_bytes)
    return _linear_forward(x, params, tm=tm)


def _linear_forward(x, p: PreparedLinear, *, tm: int = 256):
    *lead, K = x.shape
    assert K == p.in_features, f"in_features mismatch: x has {K}, weight has {p.in_features}"
    N = p.out_features
    M = int(math.prod(lead)) if lead else 1
    Kp, Np = p.w_t.shape
    tn, tk = p.tn, p.tk
    out_dtype = x.dtype

    # Keep LHS tiles at least 128 rows (MXU stays full; padded rows sliced off).
    tm = min(tm, _round_up(max(M, 1), 128))
    Mp = _round_up(max(M, 1), tm)

    x2d = x.reshape(M, K).astype(p.compute_dtype)
    if (Mp, Kp) != (M, K):
        x2d = jnp.pad(x2d, ((0, Mp - M), (0, Kp - K)))

    in_b = jnp.dtype(p.compute_dtype).itemsize
    out_b = jnp.dtype(out_dtype).itemsize
    gm, gn, gk = Mp // tm, Np // tn, Kp // tk

    # Real HBM traffic: x refetched gn times, W refetched gm times, + output + bias.
    cost = pl.CostEstimate(
        flops=2 * Mp * Np * Kp,
        transcendentals=0,
        bytes_accessed=(Mp * Kp * in_b * gn + Kp * Np * in_b * gm
                        + Mp * Np * out_b + Np * 4),
    )

    # VMEM budget from actual tile footprint (double-buffered in/out, f32 acc if
    # K-tiled) + 25% headroom; capped well under v7x's 64 MiB physical VMEM.
    footprint = (2 * (tm * tk + tk * tn) * in_b
                 + 2 * tm * tn * out_b
                 + (0 if p.full_k else tm * tn * 4)
                 + 2 * tn * 4)
    vmem_limit = int(footprint * 1.25) + (2 << 20)
    vmem_limit = max(16 * 1024 * 1024, min(vmem_limit, 60 * 1024 * 1024))

    # NOTE(v7x): gm*gn >= 2 keeps both TensorCores busy; with tn=512 any N>=1024
    # or M>=512 already splits across the parallel axes.
    if p.full_k:
        out = pl.pallas_call(
            _linear_kernel_fullk,
            out_shape=jax.ShapeDtypeStruct((Mp, Np), out_dtype),
            grid_spec=pltpu.PrefetchScalarGridSpec(
                num_scalar_prefetch=0,
                grid=(gm, gn),
                in_specs=[
                    pl.BlockSpec((tm, Kp), lambda i, j: (i, 0)),   # x tile (full K)
                    pl.BlockSpec((Kp, tn), lambda i, j: (0, j)),   # W_t tile (full K)
                    pl.BlockSpec((1, tn), lambda i, j: (0, j)),    # bias tile
                ],
                out_specs=pl.BlockSpec((tm, tn), lambda i, j: (i, j)),
            ),
            compiler_params=pltpu.CompilerParams(
                dimension_semantics=("parallel", "parallel"),
                vmem_limit_bytes=vmem_limit,
            ),
            cost_estimate=cost,
        )(x2d, p.w_t, p.b_row)
    else:
        out = pl.pallas_call(
            _linear_kernel_ktiled,
            out_shape=jax.ShapeDtypeStruct((Mp, Np), out_dtype),
            grid_spec=pltpu.PrefetchScalarGridSpec(
                num_scalar_prefetch=0,
                grid=(gm, gn, gk),
                in_specs=[
                    pl.BlockSpec((tm, tk), lambda i, j, k: (i, k)),   # x tile
                    pl.BlockSpec((tk, tn), lambda i, j, k: (k, j)),   # W_t tile
                    pl.BlockSpec((1, tn), lambda i, j, k: (0, j)),    # bias tile
                ],
                out_specs=pl.BlockSpec((tm, tn), lambda i, j, k: (i, j)),
                scratch_shapes=[pltpu.VMEM((tm, tn), jnp.float32)],
            ),
            compiler_params=pltpu.CompilerParams(
                dimension_semantics=("parallel", "parallel", "arbitrary"),
                vmem_limit_bytes=vmem_limit,
            ),
            cost_estimate=cost,
        )(x2d, p.w_t, p.b_row)

    out = out[:M, :N]
    return out.reshape(*lead, N)


# ----------------------------------------------------------------------------- init
def init_linear_norm_params(key, in_features, out_features, activation="relu",
                            dtype=jnp.float32):
    """Matches LinearNorm.__init__: xavier_normal_(gain=calculate_gain('relu')), bias=0."""
    gain = math.sqrt(2.0)  # nn.init.calculate_gain('relu')
    std = gain * math.sqrt(2.0 / (in_features + out_features))
    weight = std * jax.random.normal(key, (out_features, in_features), dtype=dtype)
    bias = jnp.zeros((out_features,), dtype=dtype)
    return weight, bias


if __name__ == "__main__":
    key = jax.random.PRNGKey(0)
    k_w, k_x, k_w2, k_x2 = jax.random.split(key, 4)

    # --- demo shape consistent with the module (full-K path) -----------------
    batch, seq, in_features, out_features = 2, 8, 32, 64
    weight, bias = init_linear_norm_params(k_w, in_features, out_features)
    params = prepare_linear_norm_params(weight, bias)      # one-time weight prep
    x = jax.random.normal(k_x, (batch, seq, in_features), dtype=jnp.float32)

    y = linear_norm(x, params)
    jax.block_until_ready(y)
    y_ref = x @ weight.T + bias
    assert y.shape == (batch, seq, out_features)
    assert jnp.allclose(y, y_ref, atol=5e-2, rtol=5e-2), "mismatch on demo shape"

    # --- second shape exercising N/K padding + multi-tile grid over N --------
    b2, s2, k2, n2 = 3, 5, 200, 300
    w2, bia2 = init_linear_norm_params(k_w2, k2, n2)
    params2 = prepare_linear_norm_params(w2, bia2)
    x2 = jax.random.normal(k_x2, (b2, s2, k2), dtype=jnp.float32)
    y2 = linear_norm(x2, params2)
    jax.block_until_ready(y2)
    y2_ref = x2 @ w2.T + bia2
    assert y2.shape == (b2, s2, n2)
    assert jnp.allclose(y2, y2_ref, atol=5e-2, rtol=5e-2), "mismatch on padded shape"

    # --- force the K-tiled accumulator path (as used for very large K) -------
    params3 = prepare_linear_norm_params(w2, bia2, tk=128, full_k_vmem_bytes=0)
    y3 = linear_norm(x2, params3)
    jax.block_until_ready(y3)
    assert jnp.allclose(y3, y2_ref, atol=5e-2, rtol=5e-2), "mismatch on K-tiled path"

    print("KERNEL_OK")
</pallas_src>

<mosaic_0001>
module attributes {stable_mosaic.version = 11 : i64} {
  func.func @_linear_kernel_fullk(%arg0: i32, %arg1: i32, %arg2: memref<128x128xbf16, #tpu.memory_space<vmem>>, %arg3: memref<128x128xbf16, #tpu.memory_space<vmem>>, %arg4: memref<1x128xf32, #tpu.memory_space<vmem>>, %arg5: memref<128x128xf32, #tpu.memory_space<vmem>>) attributes {dimension_semantics = [#tpu.dimension_semantics<parallel>, #tpu.dimension_semantics<parallel>], iteration_bounds = array<i64: 1, 1>, scalar_prefetch = 0 : i64, scratch_operands = 0 : i64, tpu.core_type = #tpu.core_type<tc>, window_params = [{transform_indices = @transform_0, window_bounds = array<i64: 128, 128>}, {transform_indices = @transform_1, window_bounds = array<i64: 128, 128>}, {transform_indices = @transform_2, window_bounds = array<i64: 1, 128>}, {transform_indices = @transform_3, window_bounds = array<i64: 128, 128>}]} {
    %c0 = arith.constant 0 : index
    %c0_0 = arith.constant 0 : index
    %0 = vector.load %arg2[%c0, %c0_0] : memref<128x128xbf16, #tpu.memory_space<vmem>>, vector<128x128xbf16>
    %c0_1 = arith.constant 0 : index
    %c0_2 = arith.constant 0 : index
    %1 = vector.load %arg3[%c0_1, %c0_2] : memref<128x128xbf16, #tpu.memory_space<vmem>>, vector<128x128xbf16>
    %cst = arith.constant dense<0.000000e+00> : vector<128x128xf32>
    %2 = tpu.matmul %0, %1, %cst {dimension_numbers = #tpu.dot_dimension_numbers<[1], [0], [0], [1], [0, 0, 1, 1], [], []>} : vector<128x128xbf16>, vector<128x128xbf16>, vector<128x128xf32> -> vector<128x128xf32>
    %c0_3 = arith.constant 0 : index
    %c0_4 = arith.constant 0 : index
    %3 = vector.load %arg4[%c0_3, %c0_4] : memref<1x128xf32, #tpu.memory_space<vmem>>, vector<1x128xf32>
    %4 = vector.broadcast %3 : vector<1x128xf32> to vector<128x128xf32>
    %5 = arith.addf %2, %4 : vector<128x128xf32>
    %c0_5 = arith.constant 0 : index
    %c0_6 = arith.constant 0 : index
    %6 = vector.load %arg5[%c0_5, %c0_6] : memref<128x128xf32, #tpu.memory_space<vmem>>, vector<128x128xf32>
    tpu.vector_store %arg5[%c0_5, %c0_6], %5 {strides = array<i32>} : memref<128x128xf32, #tpu.memory_space<vmem>>, vector<128x128xf32>,
    return
  }
  func.func @transform_0(%arg0: i32, %arg1: i32) -> (i32, i32) {
    %c0_i32 = arith.constant 0 : i32
    %c0_i32_0 = arith.constant 0 : i32
    return %arg0, %c0_i32 : i32, i32
  }
  func.func @transform_1(%arg0: i32, %arg1: i32) -> (i32, i32) {
    %c0_i32 = arith.constant 0 : i32
    %c0_i32_0 = arith.constant 0 : i32
    return %c0_i32, %arg1 : i32, i32
  }
  func.func @transform_2(%arg0: i32, %arg1: i32) -> (i32, i32) {
    %c0_i32 = arith.constant 0 : i32
    %c0_i32_0 = arith.constant 0 : i32
    return %c0_i32, %arg1 : i32, i32
  }
  func.func @transform_3(%arg0: i32, %arg1: i32) -> (i32, i32) {
    %c0_i32 = arith.constant 0 : i32
    return %arg0, %arg1 : i32, i32
  }
}

</mosaic_0001>

<llo_original>
// kernel: tpu_custom_call.1
$region0: #{tpu_custom_call.1}
  #allocation0 [shape = 'u32[]', space=smem, size = 0x4, offset = 0x4, fixed_abs, tag = 'smem constant byte address 0x4 - core index']
  #allocation1 [shape = 'u32[144,128]{1,0:T(1,128)}', space=vmem, size = 0x12000, scoped, tag = 'internal scratch']
  %s0 = inlined_call_operand.hbm [shape: bf16[128,128], index: 0, kind: input, shape index: {}]
  %s1 = inlined_call_operand.hbm [shape: bf16[128,128], index: 1, kind: input, shape index: {}]
  %s2 = inlined_call_operand.vmem [shape: f32[1,128], index: 2, kind: input, shape index: {}]
  %s3 = inlined_call_operand.hbm [shape: f32[128,128], index: 3, kind: output, shape index: {}]
  %s4 = sld [smem:[#allocation0]]
  $region30: #{tpu_custom_call.1} parent=0
    _
  %s6 = ssub.s32 1, %s4
  %s7 = scalar_select 0, %s6, %s4
  $region1: #{tpu_custom_call.1} parent=0
    #allocation2 [shape = 'u8[32768]{0}', space=vmem, size = 0x8000, scoped, tag = 'input window, operand 0, single buffered']
    #allocation3 [shape = 's32[1]{0}', space=sflag, size = 0x4, scoped, tag = 'scoped memory for tpu_custom_call.1']
    #allocation4 [shape = 's32[1]{0}', space=sflag, size = 0x4, scoped, tag = 'scoped memory for tpu_custom_call.1']
    #allocation5 [shape = 'u8[32768]{0}', space=vmem, size = 0x8000, scoped, tag = 'input window, operand 1, single buffered']
    #allocation6 [shape = 's32[1]{0}', space=sflag, size = 0x4, scoped, tag = 'scoped memory for tpu_custom_call.1']
    #allocation7 [shape = 'u8[65536]{0}', space=vmem, size = 0x10000, scoped, tag = 'output window, operand 0, single buffered']
    %8 = vsyncpa [#allocation3], 0
    %9 = vsyncpa [#allocation6], 0
    %10 = vsyncpa [#allocation4], 0
    // Predicated region
    $region2: #{tpu_custom_call.1} parent=1 // pred_check
      _
    $region3: #{tpu_custom_call.1} parent=1 // pred_check_branch
      %12 = sbr.rel (0) target = $region5
    $region4: #{tpu_custom_call.1} parent=1 // pred_region
      %s14 = ssub.s32 1024, 1024
      %15 = vsyncadd [#allocation3], %s14
      %s16 = sshll.u32 [#allocation2], 4
      %s17 = int_to_ptr.vmem [resolvable:$true] %s16
      %22 = dma.hbm_to_vmem [thread:$0]  %s0, 1024, %s17, [#allocation3], 64, 64, 4
    $region5: #{tpu_custom_call.1} parent=1 // pred_fallthru
      _
    // Predicated region
    $region6: #{tpu_custom_call.1} parent=1 // pred_check
      _
    $region7: #{tpu_custom_call.1} parent=1 // pred_check_branch
      %24 = sbr.rel (0) target = $region9
    $region8: #{tpu_custom_call.1} parent=1 // pred_region
      %s26 = ssub.s32 1024, 1024
      %27 = vsyncadd [#allocation6], %s26
      %s28 = sshll.u32 [#allocation5], 4
      %s29 = int_to_ptr.vmem [resolvable:$true] %s28
      %34 = dma.hbm_to_vmem [thread:$0]  %s1, 1024, %s29, [#allocation6], 64, 64, 4
    $region9: #{tpu_custom_call.1} parent=1 // pred_fallthru
      _
    // Predicated region
    $region10: #{tpu_custom_call.1} parent=1 // pred_check
      _
    $region11: #{tpu_custom_call.1} parent=1 // pred_check_branch
      %36 = sbr.rel (0) target = $region13
    $region12: #{tpu_custom_call.1} parent=1 // pred_region
      _
    $region13: #{tpu_custom_call.1} parent=1 // pred_fallthru
      _
    // Predicated region
    $region14: #{tpu_custom_call.1} parent=1 // pred_check
      _
    $region15: #{tpu_custom_call.1} parent=1 // pred_check_branch
      %38 = sbr.rel (0) target = $region17
    $region16: #{tpu_custom_call.1} parent=1 // pred_region
      %39 = dma.done [#allocation3], 1024
    $region17: #{tpu_custom_call.1} parent=1 // pred_fallthru
      _
    // Predicated region
    $region18: #{tpu_custom_call.1} parent=1 // pred_check
      _
    $region19: #{tpu_custom_call.1} parent=1 // pred_check_branch
      %41 = sbr.rel (0) target = $region21
    $region20: #{tpu_custom_call.1} parent=1 // pred_region
      %42 = dma.done [#allocation6], 1024
    $region21: #{tpu_custom_call.1} parent=1 // pred_fallthru
      _
    %v44 = vld [vmem:[#allocation2] sm:$0xf]
    %v45 = vld [vmem:[#allocation2 + $0x4] sm:$0xf]
    %v46 = vld [vmem:[#allocation2 + $0x8] sm:$0xf]
    %v47 = vld [vmem:[#allocation2 + $0xc] sm:$0xf]
    %v48 = vld [vmem:[#allocation2 + $0x10] sm:$0xf]
    %v49 = vld [vmem:[#allocation2 + $0x14] sm:$0xf]
    %v50 = vld [vmem:[#allocation2 + $0x18] sm:$0xf]
    %v51 = vld [vmem:[#allocation2 + $0x1c] sm:$0xf]
    %v52 = vld [vmem:[#allocation2 + $0x20] sm:$0xf]
    %v53 = vld [vmem:[#allocation2 + $0x24] sm:$0xf]
    %v54 = vld [vmem:[#allocation2 + $0x28] sm:$0xf]
    %v55 = vld [vmem:[#allocation2 + $0x2c] sm:$0xf]
    %v56 = vld [vmem:[#allocation2 + $0x30] sm:$0xf]
    %v57 = vld [vmem:[#allocation2 + $0x34] sm:$0xf]
    %v58 = vld [vmem:[#allocation2 + $0x38] sm:$0xf]
    %v59 = vld [vmem:[#allocation2 + $0x3c] sm:$0xf]
    %v60 = vld [vmem:[#allocation5] sm:$0xf]
    %v61 = vld [vmem:[#allocation5 + $0x4] sm:$0xf]
    %v62 = vld [vmem:[#allocation5 + $0x8] sm:$0xf]
    %v63 = vld [vmem:[#allocation5 + $0xc] sm:$0xf]
    %v64 = vld [vmem:[#allocation5 + $0x10] sm:$0xf]
    %v65 = vld [vmem:[#allocation5 + $0x14] sm:$0xf]
    %v66 = vld [vmem:[#allocation5 + $0x18] sm:$0xf]
    %v67 = vld [vmem:[#allocation5 + $0x1c] sm:$0xf]
    %v68 = vld [vmem:[#allocation5 + $0x20] sm:$0xf]
    %v69 = vld [vmem:[#allocation5 + $0x24] sm:$0xf]
    %v70 = vld [vmem:[#allocation5 + $0x28] sm:$0xf]
    %v71 = vld [vmem:[#allocation5 + $0x2c] sm:$0xf]
    %v72 = vld [vmem:[#allocation5 + $0x30] sm:$0xf]
    %v73 = vld [vmem:[#allocation5 + $0x34] sm:$0xf]
    %v74 = vld [vmem:[#allocation5 + $0x38] sm:$0xf]
    %v75 = vld [vmem:[#allocation5 + $0x3c] sm:$0xf]
    %v76 = vld [vmem:[%s2] sm:$0x1]
    %v78 = vlaneseq
    %v79 = vshrl.u32 %v78, 7
    %v80 = vsub.s32 0, %v79
    %v81 = vrot.slane %v76, %v80
    %v99 = vunpack.c.l.b16 %v44
    %v100 = vunpack.c.l.b16 %v45
    %v101 = vunpack.c.l.b16 %v46
    %v102 = vunpack.c.l.b16 %v47
    %v103 = vunpack.c.l.b16 %v48
    %v104 = vunpack.c.l.b16 %v49
    %v105 = vunpack.c.l.b16 %v50
    %v106 = vunpack.c.l.b16 %v51
    %v107 = vunpack.c.l.b16 %v52
    %v108 = vunpack.c.l.b16 %v53
    %v109 = vunpack.c.l.b16 %v54
    %v110 = vunpack.c.l.b16 %v55
    %v111 = vunpack.c.l.b16 %v56
    %v112 = vunpack.c.l.b16 %v57
    %v113 = vunpack.c.l.b16 %v58
    %v114 = vunpack.c.l.b16 %v59
    %v115 = vpack.c.b16 %v100, %v99
    %v116 = vpack.c.b16 %v102, %v101
    %v117 = vpack.c.b16 %v104, %v103
    %v118 = vpack.c.b16 %v106, %v105
    %v119 = vpack.c.b16 %v108, %v107
    %v120 = vpack.c.b16 %v110, %v109
    %v121 = vpack.c.b16 %v112, %v111
    %v122 = vpack.c.b16 %v114, %v113
    %v147 = vunpack.c.l.b16 %v60
    %v148 = vunpack.c.l.b16 %v61
    %v149 = vunpack.c.l.b16 %v62
    %v150 = vunpack.c.l.b16 %v63
    %v151 = vunpack.c.l.b16 %v64
    %v152 = vunpack.c.l.b16 %v65
    %v153 = vunpack.c.l.b16 %v66
    %v154 = vunpack.c.l.b16 %v67
    %v155 = vunpack.c.l.b16 %v68
    %v156 = vunpack.c.l.b16 %v69
    %v157 = vunpack.c.l.b16 %v70
    %v158 = vunpack.c.l.b16 %v71
    %v159 = vunpack.c.l.b16 %v72
    %v160 = vunpack.c.l.b16 %v73
    %v161 = vunpack.c.l.b16 %v74
    %v162 = vunpack.c.l.b16 %v75
    %v163 = vpack.c.b16 %v148, %v147
    %v164 = vpack.c.b16 %v150, %v149
    %v165 = vpack.c.b16 %v152, %v151
    %v166 = vpack.c.b16 %v154, %v153
    %v167 = vpack.c.b16 %v156, %v155
    %v168 = vpack.c.b16 %v158, %v157
    %v169 = vpack.c.b16 %v160, %v159
    %v170 = vpack.c.b16 %v162, %v161
    %179 = vmatprep.subr.bf16.mxu0 0
    %180 = vmatpush1.bf16.msra.mxu0 %v163
    %181 = vmatprep.subr.bf16.mxu0 0
    %182 = vmatpush1.bf16.msra.mxu0 %v164
    %183 = vmatprep.subr.bf16.mxu0 0
    %184 = vmatpush1.bf16.msra.mxu0 %v165
    %185 = vmatprep.subr.bf16.mxu0 0
    %186 = vmatpush1.bf16.msra.mxu0 %v166
    %187 = vmatprep.subr.bf16.mxu0 0
    %188 = vmatpush1.bf16.msra.mxu0 %v167
    %189 = vmatprep.subr.bf16.mxu0 0
    %190 = vmatpush1.bf16.msra.mxu0 %v168
    %191 = vmatprep.subr.bf16.mxu0 0
    %192 = vmatpush1.bf16.msra.mxu0 %v169
    %193 = vmatprep.subr.bf16.mxu0 0
    %194 = vmatpush1.bf16.msra.mxu0 %v170
    %195 = vmatprep.subr.bf16.mxu0 0
    %196 = vmatpush1.bf16.msra.mxu0 0
    %197 = vmatprep.subr.bf16.mxu0 0
    %198 = vmatpush1.bf16.msra.mxu0 0
    %199 = vmatprep.subr.bf16.mxu0 0
    %200 = vmatpush1.bf16.msra.mxu0 0
    %201 = vmatprep.subr.bf16.mxu0 0
    %202 = vmatpush1.bf16.msra.mxu0 0
    %203 = vmatprep.subr.bf16.mxu0 0
    %204 = vmatpush1.bf16.msra.mxu0 0
    %205 = vmatprep.subr.bf16.mxu0 0
    %206 = vmatpush1.bf16.msra.mxu0 0
    %207 = vmatprep.subr.bf16.mxu0 0
    %208 = vmatpush1.bf16.msra.mxu0 0
    %209 = vmatprep.subr.bf16.mxu0 0
    %210 = vmatpush1.bf16.msra.mxu0 0
    %211 = vmatprep.mubr.bf16.mxu0 0
    %212 = vmatmul.mubr.bf16.gmra.mrb[0].mxu0 %v115
    %v213 = vpop.f32.mrb[0].mxu0
    %v214 = vadd.f32 %v81, %v213
    %v215 = vpop.f32.mrb[0].mxu0
    %v216 = vpop.f32.mrb[0].mxu0
    %v217 = vadd.f32 %v81, %v216
    %v218 = vpop.f32.mrb[0].mxu0
    %219 = vmatprep.mubr.bf16.mxu0 0
    %220 = vmatmul.mubr.bf16.gmra.mrb[0].mxu0 %v116
    %v221 = vpop.f32.mrb[0].mxu0
    %v222 = vadd.f32 %v81, %v221
    %v223 = vpop.f32.mrb[0].mxu0
    %v224 = vpop.f32.mrb[0].mxu0
    %v225 = vadd.f32 %v81, %v224
    %v226 = vpop.f32.mrb[0].mxu0
    %227 = vmatprep.mubr.bf16.mxu0 0
    %228 = vmatmul.mubr.bf16.gmra.mrb[0].mxu0 %v117
    %v229 = vpop.f32.mrb[0].mxu0
    %v230 = vadd.f32 %v81, %v229
    %v231 = vpop.f32.mrb[0].mxu0
    %v232 = vpop.f32.mrb[0].mxu0
    %v233 = vadd.f32 %v81, %v232
    %v234 = vpop.f32.mrb[0].mxu0
    %235 = vmatprep.mubr.bf16.mxu0 0
    %236 = vmatmul.mubr.bf16.gmra.mrb[0].mxu0 %v118
    %v237 = vpop.f32.mrb[0].mxu0
    %v238 = vadd.f32 %v81, %v237
    %v239 = vpop.f32.mrb[0].mxu0
    %v240 = vpop.f32.mrb[0].mxu0
    %v241 = vadd.f32 %v81, %v240
    %v242 = vpop.f32.mrb[0].mxu0
    %243 = vmatprep.mubr.bf16.mxu0 0
    %244 = vmatmul.mubr.bf16.gmra.mrb[0].mxu0 %v119
    %v245 = vpop.f32.mrb[0].mxu0
    %v246 = vadd.f32 %v81, %v245
    %v247 = vpop.f32.mrb[0].mxu0
    %v248 = vpop.f32.mrb[0].mxu0
    %v249 = vadd.f32 %v81, %v248
    %v250 = vpop.f32.mrb[0].mxu0
    %251 = vmatprep.mubr.bf16.mxu0 0
    %252 = vmatmul.mubr.bf16.gmra.mrb[0].mxu0 %v120
    %v253 = vpop.f32.mrb[0].mxu0
    %v254 = vadd.f32 %v81, %v253
    %v255 = vpop.f32.mrb[0].mxu0
    %v256 = vpop.f32.mrb[0].mxu0
    %v257 = vadd.f32 %v81, %v256
    %v258 = vpop.f32.mrb[0].mxu0
    %259 = vmatprep.mubr.bf16.mxu0 0
    %260 = vmatmul.mubr.bf16.gmra.mrb[0].mxu0 %v121
    %v261 = vpop.f32.mrb[0].mxu0
    %v262 = vadd.f32 %v81, %v261
    %v263 = vpop.f32.mrb[0].mxu0
    %v264 = vpop.f32.mrb[0].mxu0
    %v265 = vadd.f32 %v81, %v264
    %v266 = vpop.f32.mrb[0].mxu0
    %267 = vmatprep.mubr.bf16.mxu0 0
    %268 = vmatmul.mubr.bf16.gmra.mrb[0].mxu0 %v122
    %v269 = vpop.f32.mrb[0].mxu0
    %v270 = vadd.f32 %v81, %v269
    %v271 = vpop.f32.mrb[0].mxu0
    %v272 = vpop.f32.mrb[0].mxu0
    %v273 = vadd.f32 %v81, %v272
    %v274 = vpop.f32.mrb[0].mxu0
    %275 = vdwg.mxu0
    %276 = vst [vmem:[#allocation7] sm:$0xff] %v214
    %277 = vst [vmem:[#allocation7 + $0x8] sm:$0xff] %v217
    %278 = vst [vmem:[#allocation7 + $0x10] sm:$0xff] %v222
    %279 = vst [vmem:[#allocation7 + $0x18] sm:$0xff] %v225
    %280 = vst [vmem:[#allocation7 + $0x20] sm:$0xff] %v230
    %281 = vst [vmem:[#allocation7 + $0x28] sm:$0xff] %v233
    %282 = vst [vmem:[#allocation7 + $0x30] sm:$0xff] %v238
    %283 = vst [vmem:[#allocation7 + $0x38] sm:$0xff] %v241
    %284 = vst [vmem:[#allocation7 + $0x40] sm:$0xff] %v246
    %285 = vst [vmem:[#allocation7 + $0x48] sm:$0xff] %v249
    %286 = vst [vmem:[#allocation7 + $0x50] sm:$0xff] %v254
    %287 = vst [vmem:[#allocation7 + $0x58] sm:$0xff] %v257
    %288 = vst [vmem:[#allocation7 + $0x60] sm:$0xff] %v262
    %289 = vst [vmem:[#allocation7 + $0x68] sm:$0xff] %v265
    %290 = vst [vmem:[#allocation7 + $0x70] sm:$0xff] %v270
    %291 = vst [vmem:[#allocation7 + $0x78] sm:$0xff] %v273
    // Predicated region
    $region22: #{tpu_custom_call.1} parent=1 // pred_check
      _
    $region23: #{tpu_custom_call.1} parent=1 // pred_check_branch
      %293 = sbr.rel (0) target = $region25
    $region24: #{tpu_custom_call.1} parent=1 // pred_region
      %s295 = ssub.s32 2048, 2048
      %296 = vsyncadd [#allocation4], %s295
      %s297 = sshll.u32 [#allocation7], 4
      %s298 = int_to_ptr.vmem [resolvable:$true] %s297
      %303 = dma.vmem_to_hbm [thread:$0]  %s298, 2048, %s3, [#allocation4], 128, 128, 8
    $region25: #{tpu_custom_call.1} parent=1 // pred_fallthru
      _
    // Predicated region
    $region26: #{tpu_custom_call.1} parent=1 // pred_check
      _
    $region27: #{tpu_custom_call.1} parent=1 // pred_check_branch
      %305 = sbr.rel (0) target = $region29
    $region28: #{tpu_custom_call.1} parent=1 // pred_region
      %306 = dma.done [#allocation4], 2048
    $region29: #{tpu_custom_call.1} parent=1 // pred_fallthru
      _
    %307 = vsyncpa [#allocation3], 1
    %308 = vsyncpa [#allocation6], 1
    %309 = vsyncpa [#allocation4], 1

</llo_original>
